<compile_context>
chip_gen: v7x
topology: tpu7x:2x2x1
jax: 0.10.0
libtpu: 0.0.40
codegen_flags: <defaults>
</compile_context>

<pallas_src>
import functools
import math

import jax
import jax.numpy as jnp
import numpy as np
from jax import lax
from jax.experimental import pallas as pl
from jax.experimental.pallas import tpu as pltpu


def _round_up(x, m):
    return ((x + m - 1) // m) * m


def _choose_fold(n, t):
    """k for the free (N, T) -> (N/k, k*T) lane-densifying reshape (no copy)."""
    if t >= 128:
        return 1
    candidates = []
    k_lcm = 128 // math.gcd(t, 128)        # smallest k with (k*T) % 128 == 0
    if k_lcm * t <= 1024:
        candidates.append(k_lcm)
    kk = max(1, 128 // t)
    while kk >= 1:
        if kk not in candidates:
            candidates.append(kk)
        kk //= 2
    for k in candidates:
        if n % k == 0:
            return k
    # TODO(synk): N not divisible by any lane-dense fold factor -> run with
    # partially used lanes rather than materializing a padded copy of the
    # whole stream (the kernel is HBM-bound; the copy would cost more).
    return 1


def _partial_sums_kernel(yt_ref, yp_ref, out_ref,
                         p_acc, ts_acc, tss_acc, ps_acc, pss_acc,
                         *, n_valid_rows):
    """Streaming per-target sums over the (folded) batch axis.

    Grid is (P, Lb, S): P = TensorCore split, Lb = lane blocks (usually 1),
    S = reduction steps (innermost).  out block (5, tile_l) is resident
    across S and written once in the flush.
    """
    s = pl.program_id(2)
    n_s = pl.num_programs(2)
    blk = pl.program_id(0) * n_s + s          # global row-block idx (unclamped)
    tile_n, tile_l = yt_ref.shape             # static tile shape
    valid = n_valid_rows - blk * tile_n       # real rows in this block

    @pl.when(s == 0)
    def _init():
        p_acc[...] = jnp.zeros_like(p_acc)
        ts_acc[...] = jnp.zeros_like(ts_acc)
        tss_acc[...] = jnp.zeros_like(tss_acc)
        ps_acc[...] = jnp.zeros_like(ps_acc)
        pss_acc[...] = jnp.zeros_like(pss_acc)

    # TODO(synk): if VALU ever saturates on v7x, offload the two plain column
    # sums (sum yt, sum yp) to the idle MXU via a ones(8, tile_n) @ tile.
    if tile_n % 8 == 0:
        groups = tile_n // 8

        def _accumulate(yt, yp):
            # Pure-VALU accumulation into full-sublane (8, tile_l) scratch:
            # exactly 3 muls + 5 adds per element pair, no per-step XLU work.
            yt = yt.reshape(groups, 8, tile_l)
            yp = yp.reshape(groups, 8, tile_l)
            p_acc[...] += jnp.sum(yt * yp, axis=0)
            ts_acc[...] += jnp.sum(yt, axis=0)
            tss_acc[...] += jnp.sum(yt * yt, axis=0)
            ps_acc[...] += jnp.sum(yp, axis=0)
            pss_acc[...] += jnp.sum(yp * yp, axis=0)
    else:
        # Degenerate tiny-batch fallback (tile_n < 8): single-row accumulate.
        def _accumulate(yt, yp):
            p_acc[0:1, :] += jnp.sum(yt * yp, axis=0, keepdims=True)
            ts_acc[0:1, :] += jnp.sum(yt, axis=0, keepdims=True)
            tss_acc[0:1, :] += jnp.sum(yt * yt, axis=0, keepdims=True)
            ps_acc[0:1, :] += jnp.sum(yp, axis=0, keepdims=True)
            pss_acc[0:1, :] += jnp.sum(yp * yp, axis=0, keepdims=True)

    @pl.when(valid >= tile_n)
    def _full():              # fast path: no masking on interior blocks
        _accumulate(yt_ref[...].astype(jnp.float32),
                    yp_ref[...].astype(jnp.float32))

    @pl.when(valid < tile_n)
    def _tail():              # ragged last block / clamped duplicate block
        rows = lax.broadcasted_iota(jnp.int32, (tile_n, tile_l), 0)
        keep = rows < valid   # where() kills NaN/Inf garbage in padded rows
        _accumulate(jnp.where(keep, yt_ref[...].astype(jnp.float32), 0.0),
                    jnp.where(keep, yp_ref[...].astype(jnp.float32), 0.0))

    @pl.when(s == n_s - 1)
    def _flush():
        # One cross-sublane (XLU) reduce per accumulator, once per (P,Lb) slab.
        out_ref[0:1, :] = jnp.sum(p_acc[...], axis=0, keepdims=True)
        out_ref[1:2, :] = jnp.sum(ts_acc[...], axis=0, keepdims=True)
        out_ref[2:3, :] = jnp.sum(tss_acc[...], axis=0, keepdims=True)
        out_ref[3:4, :] = jnp.sum(ps_acc[...], axis=0, keepdims=True)
        out_ref[4:5, :] = jnp.sum(pss_acc[...], axis=0, keepdims=True)


def _finalize_kernel(state_ref, inc_ref, corr_ref, newstate_ref):
    """new_state = state + increments; per-target Pearson correlation."""
    new = state_ref[...] + inc_ref[...]
    newstate_ref[...] = new

    count = new[0:1, :]
    product = new[1:2, :]
    true_sum = new[2:3, :]
    true_sumsq = new[3:4, :]
    pred_sum = new[4:5, :]
    pred_sumsq = new[5:6, :]

    true_mean = true_sum / count
    pred_mean = pred_sum / count
    covariance = (product
                  - true_mean * pred_sum
                  - pred_mean * true_sum
                  + count * true_mean * pred_mean)
    true_var = true_sumsq - count * true_mean * true_mean
    pred_var = pred_sumsq - count * pred_mean * pred_mean
    # TODO(synk): no zero-variance / epsilon guard — matches the PyTorch
    # reference, which also yields inf/NaN for constant target columns.
    corr_ref[...] = covariance / jnp.sqrt(true_var * pred_var)


def pearson_r(y_true, y_pred, state, *, summarize=True,
              max_tile_rows=8192, max_tile_lanes=2048):
    """Functional forward pass of PearsonR: returns (result, new_state).

    Args:
      y_true, y_pred: (N, T) floats (f32 or bf16).
      state: (6, T) f32 running buffers in row order
             (count, product, true_sum, true_sumsq, pred_sum, pred_sumsq).
    """
    N, T = y_true.shape
    assert y_pred.shape == (N, T)
    assert state.shape == (6, T)

    # ---- lane-dense re-layout: free reshape, NO padded copies --------------
    k = _choose_fold(N, T)
    n2 = N // k
    L = k * T
    yt = y_true.reshape(n2, L)
    yp = y_pred.reshape(n2, L)

    itemsize = jnp.dtype(y_true.dtype).itemsize

    # ---- generation-aware VMEM sizing (v7x: 64 MiB/TC; v5e/v6e: 128 MiB) ---
    try:
        vmem_cap = int(pltpu.get_tpu_info().vmem_capacity_bytes)
    except Exception:
        vmem_cap = 64 * 1024 * 1024
    vmem_limit = int(min(max(32 * 1024 * 1024, vmem_cap // 2),
                         48 * 1024 * 1024))
    in_budget = min(16 * 1024 * 1024, vmem_limit // 3)

    # ---- lane blocking only for very wide (folded) target dims -------------
    tile_l = L if L <= max_tile_lanes else max_tile_lanes
    n_lb = -(-L // tile_l)

    # ---- row tile from VMEM budget (2 inputs x 2 pipeline buffers) ---------
    bytes_per_row = 2 * 2 * _round_up(tile_l, 128) * itemsize
    budget_rows = max(32, in_budget // bytes_per_row)
    if n2 >= 32:
        tile_n = max(32, min(max_tile_rows, (budget_rows // 32) * 32,
                             (n2 // 32) * 32))
    elif n2 >= 8:
        tile_n = (n2 // 8) * 8
    else:
        tile_n = n2

    steps = -(-n2 // tile_n)
    # Always split across both TensorCores when there is >1 step (v7x);
    # harmless extra grid dim on single-TC v5e/v6e.
    P = 2 if steps >= 2 else 1
    S = -(-steps // P)
    nblocks = steps

    # Clamp out-of-range block indices (odd step counts) back into bounds; the
    # kernel masks duplicate blocks to zero contribution via `valid`.
    in_map = lambda p, l, s: (jnp.minimum(p * S + s, nblocks - 1), l)

    partial = pl.pallas_call(
        functools.partial(_partial_sums_kernel, n_valid_rows=n2),
        out_shape=jax.ShapeDtypeStruct((P, 5, L), jnp.float32),
        grid_spec=pltpu.PrefetchScalarGridSpec(
            num_scalar_prefetch=0,
            grid=(P, n_lb, S),
            in_specs=[pl.BlockSpec((tile_n, tile_l), in_map),
                      pl.BlockSpec((tile_n, tile_l), in_map)],
            out_specs=pl.BlockSpec((None, 5, tile_l),
                                   lambda p, l, s: (p, 0, l)),
            scratch_shapes=[pltpu.VMEM((8, tile_l), jnp.float32)] * 5,
        ),
        compiler_params=pltpu.CompilerParams(
            dimension_semantics=("parallel", "parallel", "arbitrary"),
            vmem_limit_bytes=vmem_limit),
    )(yt, yp)

    # Fold TensorCore partials and lane groups back to (5, T) — O(T) glue.
    sums = partial.reshape(P, 5, k, T).sum(axis=(0, 2))
    # count increment is exactly N per target (no in-kernel ones-reduction;
    # this also keeps masked padding rows out of `count`).
    inc = jnp.concatenate(
        [jnp.full((1, T), float(N), jnp.float32), sums], axis=0)

    corr, new_state = pl.pallas_call(
        _finalize_kernel,
        out_shape=(jax.ShapeDtypeStruct((1, T), jnp.float32),
                   jax.ShapeDtypeStruct((6, T), jnp.float32)),
    )(state.astype(jnp.float32), inc)

    correlation = corr[0]
    result = jnp.mean(correlation) if summarize else correlation
    return result, new_state


def _reference(y_true, y_pred, state, summarize=True):
    """Pure-JAX replica of the PyTorch forward (for verification)."""
    count, product, true_sum, true_sumsq, pred_sum, pred_sumsq = state
    yt = y_true.astype(jnp.float32)
    yp = y_pred.astype(jnp.float32)
    product = product + jnp.sum(yt * yp, axis=0)
    true_sum = true_sum + jnp.sum(yt, axis=0)
    true_sumsq = true_sumsq + jnp.sum(yt ** 2, axis=0)
    pred_sum = pred_sum + jnp.sum(yp, axis=0)
    pred_sumsq = pred_sumsq + jnp.sum(yp ** 2, axis=0)
    count = count + jnp.sum(jnp.ones_like(yt), axis=0)
    new_state = jnp.stack(
        [count, product, true_sum, true_sumsq, pred_sum, pred_sumsq])
    true_mean = true_sum / count
    pred_mean = pred_sum / count
    covariance = (product - true_mean * pred_sum - pred_mean * true_sum
                  + count * true_mean * pred_mean)
    true_var = true_sumsq - count * true_mean ** 2
    pred_var = pred_sumsq - count * pred_mean ** 2
    correlation = covariance / jnp.sqrt(true_var * pred_var)
    result = jnp.mean(correlation) if summarize else correlation
    return result, new_state


if __name__ == "__main__":
    key = jax.random.PRNGKey(0)
    ks = jax.random.split(key, 8)
    T = 32

    def check(res, st, ref_res, ref_st):
        np.testing.assert_allclose(np.asarray(res), np.asarray(ref_res),
                                   rtol=1e-5, atol=1e-4)
        np.testing.assert_allclose(np.asarray(st), np.asarray(ref_st),
                                   rtol=1e-5, atol=1e-4)

    # --- call 1: fresh state, summarized metric (lane fold k=4) -------------
    N1 = 64
    yt1 = jax.random.normal(ks[0], (N1, T), dtype=jnp.float32)
    yp1 = 0.8 * yt1 + 0.2 * jax.random.normal(ks[1], (N1, T), dtype=jnp.float32)
    state0 = jnp.zeros((6, T), dtype=jnp.float32)
    res1, st1 = pearson_r(yt1, yp1, state0, summarize=True)
    jax.block_until_ready(st1)
    ref1, rst1 = _reference(yt1, yp1, state0, summarize=True)
    check(res1, st1, ref1, rst1)

    # --- call 2: streaming update, ragged batch -> dual-TC split + tail mask
    N2 = 112
    yt2 = jax.random.normal(ks[2], (N2, T), dtype=jnp.float32)
    yp2 = 0.5 * yt2 + 0.5 * jax.random.normal(ks[3], (N2, T), dtype=jnp.float32)
    res2, st2 = pearson_r(yt2, yp2, st1, summarize=False)
    jax.block_until_ready(st2)
    ref2, rst2 = _reference(yt2, yp2, rst1, summarize=False)
    check(res2, st2, ref2, rst2)

    # --- call 3: odd step count -> clamped duplicate block fully masked -----
    N3 = 384
    yt3 = jax.random.normal(ks[4], (N3, T), dtype=jnp.float32)
    yp3 = 0.7 * yt3 + 0.3 * jax.random.normal(ks[5], (N3, T), dtype=jnp.float32)
    res3, st3 = pearson_r(yt3, yp3, jnp.zeros((6, T), jnp.float32),
                          summarize=True, max_tile_rows=32)
    jax.block_until_ready(st3)
    ref3, rst3 = _reference(yt3, yp3, jnp.zeros((6, T), jnp.float32), True)
    check(res3, st3, ref3, rst3)

    # --- call 4: T that does not divide 128 (k=8 fold -> 384 dense lanes) ---
    N4, T4 = 40, 48
    yt4 = jax.random.normal(ks[6], (N4, T4), dtype=jnp.float32)
    yp4 = 0.6 * yt4 + 0.4 * jax.random.normal(ks[7], (N4, T4), dtype=jnp.float32)
    res4, st4 = pearson_r(yt4, yp4, jnp.zeros((6, T4), jnp.float32),
                          summarize=False)
    jax.block_until_ready(st4)
    ref4, rst4 = _reference(yt4, yp4, jnp.zeros((6, T4), jnp.float32), False)
    check(res4, st4, ref4, rst4)

    print("KERNEL_OK")
</pallas_src>

<mosaic_0001>
module attributes {stable_mosaic.version = 11 : i64} {
  func.func @_partial_sums_kernel(%arg0: i32, %arg1: i32, %arg2: i32, %arg3: memref<16x128xf32, #tpu.memory_space<vmem>>, %arg4: memref<16x128xf32, #tpu.memory_space<vmem>>, %arg5: memref<1x5x128xf32, #tpu.memory_space<vmem>>, %arg6: memref<8x128xf32, #tpu.memory_space<vmem>>, %arg7: memref<8x128xf32, #tpu.memory_space<vmem>>, %arg8: memref<8x128xf32, #tpu.memory_space<vmem>>, %arg9: memref<8x128xf32, #tpu.memory_space<vmem>>, %arg10: memref<8x128xf32, #tpu.memory_space<vmem>>) attributes {dimension_semantics = [#tpu.dimension_semantics<parallel>, #tpu.dimension_semantics<parallel>, #tpu.dimension_semantics<arbitrary>], iteration_bounds = array<i64: 1, 1, 1>, scalar_prefetch = 0 : i64, scratch_operands = 5 : i64, tpu.core_type = #tpu.core_type<tc>, window_params = [{transform_indices = @transform_0, window_bounds = array<i64: 16, 128>}, {transform_indices = @transform_1, window_bounds = array<i64: 16, 128>}, {transform_indices = @transform_2, window_bounds = array<i64: 1, 5, 128>}]} {
    %c1_i32 = arith.constant 1 : i32
    %0 = arith.muli %arg0, %c1_i32 : i32
    %1 = arith.addi %0, %arg2 : i32
    %c16_i32 = arith.constant 16 : i32
    %2 = arith.muli %1, %c16_i32 : i32
    %c16_i32_0 = arith.constant 16 : i32
    %3 = arith.subi %c16_i32_0, %2 : i32
    %c0_i32 = arith.constant 0 : i32
    %4 = arith.cmpi eq, %arg2, %c0_i32 : i32
    %5 = arith.extui %4 : i1 to i32
    %c0_i32_1 = arith.constant 0 : i32
    %6 = arith.cmpi ne, %5, %c0_i32_1 : i32
    scf.if %6 {
      %cst = arith.constant 0.000000e+00 : f32
      %16 = vector.broadcast %cst : f32 to vector<8x128xf32>
      %c0 = arith.constant 0 : index
      %c0_8 = arith.constant 0 : index
      %17 = vector.load %arg6[%c0, %c0_8] : memref<8x128xf32, #tpu.memory_space<vmem>>, vector<8x128xf32>
      tpu.vector_store %arg6[%c0, %c0_8], %16 {strides = array<i32>} : memref<8x128xf32, #tpu.memory_space<vmem>>, vector<8x128xf32>,
      %cst_9 = arith.constant 0.000000e+00 : f32
      %18 = vector.broadcast %cst_9 : f32 to vector<8x128xf32>
      %c0_10 = arith.constant 0 : index
      %c0_11 = arith.constant 0 : index
      %19 = vector.load %arg7[%c0_10, %c0_11] : memref<8x128xf32, #tpu.memory_space<vmem>>, vector<8x128xf32>
      tpu.vector_store %arg7[%c0_10, %c0_11], %18 {strides = array<i32>} : memref<8x128xf32, #tpu.memory_space<vmem>>, vector<8x128xf32>,
      %cst_12 = arith.constant 0.000000e+00 : f32
      %20 = vector.broadcast %cst_12 : f32 to vector<8x128xf32>
      %c0_13 = arith.constant 0 : index
      %c0_14 = arith.constant 0 : index
      %21 = vector.load %arg8[%c0_13, %c0_14] : memref<8x128xf32, #tpu.memory_space<vmem>>, vector<8x128xf32>
      tpu.vector_store %arg8[%c0_13, %c0_14], %20 {strides = array<i32>} : memref<8x128xf32, #tpu.memory_space<vmem>>, vector<8x128xf32>,
      %cst_15 = arith.constant 0.000000e+00 : f32
      %22 = vector.broadcast %cst_15 : f32 to vector<8x128xf32>
      %c0_16 = arith.constant 0 : index
      %c0_17 = arith.constant 0 : index
      %23 = vector.load %arg9[%c0_16, %c0_17] : memref<8x128xf32, #tpu.memory_space<vmem>>, vector<8x128xf32>
      tpu.vector_store %arg9[%c0_16, %c0_17], %22 {strides = array<i32>} : memref<8x128xf32, #tpu.memory_space<vmem>>, vector<8x128xf32>,
      %cst_18 = arith.constant 0.000000e+00 : f32
      %24 = vector.broadcast %cst_18 : f32 to vector<8x128xf32>
      %c0_19 = arith.constant 0 : index
      %c0_20 = arith.constant 0 : index
      %25 = vector.load %arg10[%c0_19, %c0_20] : memref<8x128xf32, #tpu.memory_space<vmem>>, vector<8x128xf32>
      tpu.vector_store %arg10[%c0_19, %c0_20], %24 {strides = array<i32>} : memref<8x128xf32, #tpu.memory_space<vmem>>, vector<8x128xf32>,
    } else {
    }
    %c16_i32_2 = arith.constant 16 : i32
    %7 = arith.cmpi sge, %3, %c16_i32_2 : i32
    %8 = arith.extui %7 : i1 to i32
    %c0_i32_3 = arith.constant 0 : i32
    %9 = arith.cmpi ne, %8, %c0_i32_3 : i32
    scf.if %9 {
      %c0 = arith.constant 0 : index
      %c0_8 = arith.constant 0 : index
      %16 = vector.load %arg3[%c0, %c0_8] : memref<16x128xf32, #tpu.memory_space<vmem>>, vector<16x128xf32>
      %c0_9 = arith.constant 0 : index
      %c0_10 = arith.constant 0 : index
      %17 = vector.load %arg4[%c0_9, %c0_10] : memref<16x128xf32, #tpu.memory_space<vmem>>, vector<16x128xf32>
      %18 = vector.shape_cast %16 : vector<16x128xf32> to vector<2x8x128xf32>
      %19 = vector.shape_cast %17 : vector<16x128xf32> to vector<2x8x128xf32>
      %c0_11 = arith.constant 0 : index
      %c0_12 = arith.constant 0 : index
      %20 = vector.load %arg6[%c0_11, %c0_12] : memref<8x128xf32, #tpu.memory_space<vmem>>, vector<8x128xf32>
      %21 = arith.mulf %18, %19 : vector<2x8x128xf32>
      %cst = arith.constant dense<0.000000e+00> : vector<8x128xf32>
      %22 = vector.multi_reduction <add>, %21, %cst [0] : vector<2x8x128xf32> to vector<8x128xf32>
      %23 = arith.addf %20, %22 : vector<8x128xf32>
      %c0_13 = arith.constant 0 : index
      %c0_14 = arith.constant 0 : index
      %24 = vector.load %arg6[%c0_13, %c0_14] : memref<8x128xf32, #tpu.memory_space<vmem>>, vector<8x128xf32>
      tpu.vector_store %arg6[%c0_13, %c0_14], %23 {strides = array<i32>} : memref<8x128xf32, #tpu.memory_space<vmem>>, vector<8x128xf32>,
      %c0_15 = arith.constant 0 : index
      %c0_16 = arith.constant 0 : index
      %25 = vector.load %arg7[%c0_15, %c0_16] : memref<8x128xf32, #tpu.memory_space<vmem>>, vector<8x128xf32>
      %cst_17 = arith.constant dense<0.000000e+00> : vector<8x128xf32>
      %26 = vector.multi_reduction <add>, %18, %cst_17 [0] : vector<2x8x128xf32> to vector<8x128xf32>
      %27 = arith.addf %25, %26 : vector<8x128xf32>
      %c0_18 = arith.constant 0 : index
      %c0_19 = arith.constant 0 : index
      %28 = vector.load %arg7[%c0_18, %c0_19] : memref<8x128xf32, #tpu.memory_space<vmem>>, vector<8x128xf32>
      tpu.vector_store %arg7[%c0_18, %c0_19], %27 {strides = array<i32>} : memref<8x128xf32, #tpu.memory_space<vmem>>, vector<8x128xf32>,
      %c0_20 = arith.constant 0 : index
      %c0_21 = arith.constant 0 : index
      %29 = vector.load %arg8[%c0_20, %c0_21] : memref<8x128xf32, #tpu.memory_space<vmem>>, vector<8x128xf32>
      %30 = arith.mulf %18, %18 : vector<2x8x128xf32>
      %cst_22 = arith.constant dense<0.000000e+00> : vector<8x128xf32>
      %31 = vector.multi_reduction <add>, %30, %cst_22 [0] : vector<2x8x128xf32> to vector<8x128xf32>
      %32 = arith.addf %29, %31 : vector<8x128xf32>
      %c0_23 = arith.constant 0 : index
      %c0_24 = arith.constant 0 : index
      %33 = vector.load %arg8[%c0_23, %c0_24] : memref<8x128xf32, #tpu.memory_space<vmem>>, vector<8x128xf32>
      tpu.vector_store %arg8[%c0_23, %c0_24], %32 {strides = array<i32>} : memref<8x128xf32, #tpu.memory_space<vmem>>, vector<8x128xf32>,
      %c0_25 = arith.constant 0 : index
      %c0_26 = arith.constant 0 : index
      %34 = vector.load %arg9[%c0_25, %c0_26] : memref<8x128xf32, #tpu.memory_space<vmem>>, vector<8x128xf32>
      %cst_27 = arith.constant dense<0.000000e+00> : vector<8x128xf32>
      %35 = vector.multi_reduction <add>, %19, %cst_27 [0] : vector<2x8x128xf32> to vector<8x128xf32>
      %36 = arith.addf %34, %35 : vector<8x128xf32>
      %c0_28 = arith.constant 0 : index
      %c0_29 = arith.constant 0 : index
      %37 = vector.load %arg9[%c0_28, %c0_29] : memref<8x128xf32, #tpu.memory_space<vmem>>, vector<8x128xf32>
      tpu.vector_store %arg9[%c0_28, %c0_29], %36 {strides = array<i32>} : memref<8x128xf32, #tpu.memory_space<vmem>>, vector<8x128xf32>,
      %c0_30 = arith.constant 0 : index
      %c0_31 = arith.constant 0 : index
      %38 = vector.load %arg10[%c0_30, %c0_31] : memref<8x128xf32, #tpu.memory_space<vmem>>, vector<8x128xf32>
      %39 = arith.mulf %19, %19 : vector<2x8x128xf32>
      %cst_32 = arith.constant dense<0.000000e+00> : vector<8x128xf32>
      %40 = vector.multi_reduction <add>, %39, %cst_32 [0] : vector<2x8x128xf32> to vector<8x128xf32>
      %41 = arith.addf %38, %40 : vector<8x128xf32>
      %c0_33 = arith.constant 0 : index
      %c0_34 = arith.constant 0 : index
      %42 = vector.load %arg10[%c0_33, %c0_34] : memref<8x128xf32, #tpu.memory_space<vmem>>, vector<8x128xf32>
      tpu.vector_store %arg10[%c0_33, %c0_34], %41 {strides = array<i32>} : memref<8x128xf32, #tpu.memory_space<vmem>>, vector<8x128xf32>,
    } else {
    }
    %c16_i32_4 = arith.constant 16 : i32
    %10 = arith.cmpi slt, %3, %c16_i32_4 : i32
    %11 = arith.extui %10 : i1 to i32
    %c0_i32_5 = arith.constant 0 : i32
    %12 = arith.cmpi ne, %11, %c0_i32_5 : i32
    scf.if %12 {
      %16 = tpu.iota {dimensions = array<i32: 0>} : vector<16x128xi32>
      %17 = vector.broadcast %3 : i32 to vector<16x128xi32>
      %18 = arith.cmpi slt, %16, %17 : vector<16x128xi32>
      %c0 = arith.constant 0 : index
      %c0_8 = arith.constant 0 : index
      %19 = vector.load %arg3[%c0, %c0_8] : memref<16x128xf32, #tpu.memory_space<vmem>>, vector<16x128xf32>
      %cst = arith.constant 0.000000e+00 : f32
      %20 = vector.broadcast %cst : f32 to vector<16x128xf32>
      %21 = arith.select %18, %19, %20 : vector<16x128xi1>, vector<16x128xf32>
      %c0_9 = arith.constant 0 : index
      %c0_10 = arith.constant 0 : index
      %22 = vector.load %arg4[%c0_9, %c0_10] : memref<16x128xf32, #tpu.memory_space<vmem>>, vector<16x128xf32>
      %cst_11 = arith.constant 0.000000e+00 : f32
      %23 = vector.broadcast %cst_11 : f32 to vector<16x128xf32>
      %24 = arith.select %18, %22, %23 : vector<16x128xi1>, vector<16x128xf32>
      %25 = vector.shape_cast %21 : vector<16x128xf32> to vector<2x8x128xf32>
      %26 = vector.shape_cast %24 : vector<16x128xf32> to vector<2x8x128xf32>
      %c0_12 = arith.constant 0 : index
      %c0_13 = arith.constant 0 : index
      %27 = vector.load %arg6[%c0_12, %c0_13] : memref<8x128xf32, #tpu.memory_space<vmem>>, vector<8x128xf32>
      %28 = arith.mulf %25, %26 : vector<2x8x128xf32>
      %cst_14 = arith.constant dense<0.000000e+00> : vector<8x128xf32>
      %29 = vector.multi_reduction <add>, %28, %cst_14 [0] : vector<2x8x128xf32> to vector<8x128xf32>
      %30 = arith.addf %27, %29 : vector<8x128xf32>
      %c0_15 = arith.constant 0 : index
      %c0_16 = arith.constant 0 : index
      %31 = vector.load %arg6[%c0_15, %c0_16] : memref<8x128xf32, #tpu.memory_space<vmem>>, vector<8x128xf32>
      tpu.vector_store %arg6[%c0_15, %c0_16], %30 {strides = array<i32>} : memref<8x128xf32, #tpu.memory_space<vmem>>, vector<8x128xf32>,
      %c0_17 = arith.constant 0 : index
      %c0_18 = arith.constant 0 : index
      %32 = vector.load %arg7[%c0_17, %c0_18] : memref<8x128xf32, #tpu.memory_space<vmem>>, vector<8x128xf32>
      %cst_19 = arith.constant dense<0.000000e+00> : vector<8x128xf32>
      %33 = vector.multi_reduction <add>, %25, %cst_19 [0] : vector<2x8x128xf32> to vector<8x128xf32>
      %34 = arith.addf %32, %33 : vector<8x128xf32>
      %c0_20 = arith.constant 0 : index
      %c0_21 = arith.constant 0 : index
      %35 = vector.load %arg7[%c0_20, %c0_21] : memref<8x128xf32, #tpu.memory_space<vmem>>, vector<8x128xf32>
      tpu.vector_store %arg7[%c0_20, %c0_21], %34 {strides = array<i32>} : memref<8x128xf32, #tpu.memory_space<vmem>>, vector<8x128xf32>,
      %c0_22 = arith.constant 0 : index
      %c0_23 = arith.constant 0 : index
      %36 = vector.load %arg8[%c0_22, %c0_23] : memref<8x128xf32, #tpu.memory_space<vmem>>, vector<8x128xf32>
      %37 = arith.mulf %25, %25 : vector<2x8x128xf32>
      %cst_24 = arith.constant dense<0.000000e+00> : vector<8x128xf32>
      %38 = vector.multi_reduction <add>, %37, %cst_24 [0] : vector<2x8x128xf32> to vector<8x128xf32>
      %39 = arith.addf %36, %38 : vector<8x128xf32>
      %c0_25 = arith.constant 0 : index
      %c0_26 = arith.constant 0 : index
      %40 = vector.load %arg8[%c0_25, %c0_26] : memref<8x128xf32, #tpu.memory_space<vmem>>, vector<8x128xf32>
      tpu.vector_store %arg8[%c0_25, %c0_26], %39 {strides = array<i32>} : memref<8x128xf32, #tpu.memory_space<vmem>>, vector<8x128xf32>,
      %c0_27 = arith.constant 0 : index
      %c0_28 = arith.constant 0 : index
      %41 = vector.load %arg9[%c0_27, %c0_28] : memref<8x128xf32, #tpu.memory_space<vmem>>, vector<8x128xf32>
      %cst_29 = arith.constant dense<0.000000e+00> : vector<8x128xf32>
      %42 = vector.multi_reduction <add>, %26, %cst_29 [0] : vector<2x8x128xf32> to vector<8x128xf32>
      %43 = arith.addf %41, %42 : vector<8x128xf32>
      %c0_30 = arith.constant 0 : index
      %c0_31 = arith.constant 0 : index
      %44 = vector.load %arg9[%c0_30, %c0_31] : memref<8x128xf32, #tpu.memory_space<vmem>>, vector<8x128xf32>
      tpu.vector_store %arg9[%c0_30, %c0_31], %43 {strides = array<i32>} : memref<8x128xf32, #tpu.memory_space<vmem>>, vector<8x128xf32>,
      %c0_32 = arith.constant 0 : index
      %c0_33 = arith.constant 0 : index
      %45 = vector.load %arg10[%c0_32, %c0_33] : memref<8x128xf32, #tpu.memory_space<vmem>>, vector<8x128xf32>
      %46 = arith.mulf %26, %26 : vector<2x8x128xf32>
      %cst_34 = arith.constant dense<0.000000e+00> : vector<8x128xf32>
      %47 = vector.multi_reduction <add>, %46, %cst_34 [0] : vector<2x8x128xf32> to vector<8x128xf32>
      %48 = arith.addf %45, %47 : vector<8x128xf32>
      %c0_35 = arith.constant 0 : index
      %c0_36 = arith.constant 0 : index
      %49 = vector.load %arg10[%c0_35, %c0_36] : memref<8x128xf32, #tpu.memory_space<vmem>>, vector<8x128xf32>
      tpu.vector_store %arg10[%c0_35, %c0_36], %48 {strides = array<i32>} : memref<8x128xf32, #tpu.memory_space<vmem>>, vector<8x128xf32>,
    } else {
    }
    %c0_i32_6 = arith.constant 0 : i32
    %13 = arith.cmpi eq, %arg2, %c0_i32_6 : i32
    %14 = arith.extui %13 : i1 to i32
    %c0_i32_7 = arith.constant 0 : i32
    %15 = arith.cmpi ne, %14, %c0_i32_7 : i32
    scf.if %15 {
      %c0 = arith.constant 0 : index
      %c0_8 = arith.constant 0 : index
      %16 = vector.load %arg6[%c0, %c0_8] : memref<8x128xf32, #tpu.memory_space<vmem>>, vector<8x128xf32>
      %cst = arith.constant dense<0.000000e+00> : vector<128xf32>
      %17 = vector.multi_reduction <add>, %16, %cst [0] : vector<8x128xf32> to vector<128xf32>
      %18 = vector.shape_cast %17 : vector<128xf32> to vector<1x128xf32>
      %c0_9 = arith.constant 0 : index
      %c0_10 = arith.constant 0 : index
      %c0_11 = arith.constant 0 : index
      %19 = vector.load %arg5[%c0_9, %c0_10, %c0_11] : memref<1x5x128xf32, #tpu.memory_space<vmem>>, vector<1x1x128xf32>
      %20 = vector.shape_cast %19 : vector<1x1x128xf32> to vector<1x128xf32>
      %21 = vector.shape_cast %18 : vector<1x128xf32> to vector<1x1x128xf32>
      tpu.vector_store %arg5[%c0_9, %c0_10, %c0_11], %21 {strides = array<i32>} : memref<1x5x128xf32, #tpu.memory_space<vmem>>, vector<1x1x128xf32>,
      %c0_12 = arith.constant 0 : index
      %c0_13 = arith.constant 0 : index
      %22 = vector.load %arg7[%c0_12, %c0_13] : memref<8x128xf32, #tpu.memory_space<vmem>>, vector<8x128xf32>
      %cst_14 = arith.constant dense<0.000000e+00> : vector<128xf32>
      %23 = vector.multi_reduction <add>, %22, %cst_14 [0] : vector<8x128xf32> to vector<128xf32>
      %24 = vector.shape_cast %23 : vector<128xf32> to vector<1x128xf32>
      %c0_15 = arith.constant 0 : index
      %c1 = arith.constant 1 : index
      %c0_16 = arith.constant 0 : index
      %25 = vector.load %arg5[%c0_15, %c1, %c0_16] : memref<1x5x128xf32, #tpu.memory_space<vmem>>, vector<1x1x128xf32>
      %26 = vector.shape_cast %25 : vector<1x1x128xf32> to vector<1x128xf32>
      %27 = vector.shape_cast %24 : vector<1x128xf32> to vector<1x1x128xf32>
      tpu.vector_store %arg5[%c0_15, %c1, %c0_16], %27 {strides = array<i32>} : memref<1x5x128xf32, #tpu.memory_space<vmem>>, vector<1x1x128xf32>,
      %c0_17 = arith.constant 0 : index
      %c0_18 = arith.constant 0 : index
      %28 = vector.load %arg8[%c0_17, %c0_18] : memref<8x128xf32, #tpu.memory_space<vmem>>, vector<8x128xf32>
      %cst_19 = arith.constant dense<0.000000e+00> : vector<128xf32>
      %29 = vector.multi_reduction <add>, %28, %cst_19 [0] : vector<8x128xf32> to vector<128xf32>
      %30 = vector.shape_cast %29 : vector<128xf32> to vector<1x128xf32>
      %c0_20 = arith.constant 0 : index
      %c2 = arith.constant 2 : index
      %c0_21 = arith.constant 0 : index
      %31 = vector.load %arg5[%c0_20, %c2, %c0_21] : memref<1x5x128xf32, #tpu.memory_space<vmem>>, vector<1x1x128xf32>
      %32 = vector.shape_cast %31 : vector<1x1x128xf32> to vector<1x128xf32>
      %33 = vector.shape_cast %30 : vector<1x128xf32> to vector<1x1x128xf32>
      tpu.vector_store %arg5[%c0_20, %c2, %c0_21], %33 {strides = array<i32>} : memref<1x5x128xf32, #tpu.memory_space<vmem>>, vector<1x1x128xf32>,
      %c0_22 = arith.constant 0 : index
      %c0_23 = arith.constant 0 : index
      %34 = vector.load %arg9[%c0_22, %c0_23] : memref<8x128xf32, #tpu.memory_space<vmem>>, vector<8x128xf32>
      %cst_24 = arith.constant dense<0.000000e+00> : vector<128xf32>
      %35 = vector.multi_reduction <add>, %34, %cst_24 [0] : vector<8x128xf32> to vector<128xf32>
      %36 = vector.shape_cast %35 : vector<128xf32> to vector<1x128xf32>
      %c0_25 = arith.constant 0 : index
      %c3 = arith.constant 3 : index
      %c0_26 = arith.constant 0 : index
      %37 = vector.load %arg5[%c0_25, %c3, %c0_26] : memref<1x5x128xf32, #tpu.memory_space<vmem>>, vector<1x1x128xf32>
      %38 = vector.shape_cast %37 : vector<1x1x128xf32> to vector<1x128xf32>
      %39 = vector.shape_cast %36 : vector<1x128xf32> to vector<1x1x128xf32>
      tpu.vector_store %arg5[%c0_25, %c3, %c0_26], %39 {strides = array<i32>} : memref<1x5x128xf32, #tpu.memory_space<vmem>>, vector<1x1x128xf32>,
      %c0_27 = arith.constant 0 : index
      %c0_28 = arith.constant 0 : index
      %40 = vector.load %arg10[%c0_27, %c0_28] : memref<8x128xf32, #tpu.memory_space<vmem>>, vector<8x128xf32>
      %cst_29 = arith.constant dense<0.000000e+00> : vector<128xf32>
      %41 = vector.multi_reduction <add>, %40, %cst_29 [0] : vector<8x128xf32> to vector<128xf32>
      %42 = vector.shape_cast %41 : vector<128xf32> to vector<1x128xf32>
      %c0_30 = arith.constant 0 : index
      %c4 = arith.constant 4 : index
      %c0_31 = arith.constant 0 : index
      %43 = vector.load %arg5[%c0_30, %c4, %c0_31] : memref<1x5x128xf32, #tpu.memory_space<vmem>>, vector<1x1x128xf32>
      %44 = vector.shape_cast %43 : vector<1x1x128xf32> to vector<1x128xf32>
      %45 = vector.shape_cast %42 : vector<1x128xf32> to vector<1x1x128xf32>
      tpu.vector_store %arg5[%c0_30, %c4, %c0_31], %45 {strides = array<i32>} : memref<1x5x128xf32, #tpu.memory_space<vmem>>, vector<1x1x128xf32>,
    } else {
    }
    return
  }
  func.func @transform_0(%arg0: i32, %arg1: i32, %arg2: i32) -> (i32, i32) {
    %c1_i32 = arith.constant 1 : i32
    %0 = arith.muli %arg0, %c1_i32 : i32
    %1 = arith.addi %0, %arg2 : i32
    %c0_i32 = arith.constant 0 : i32
    %2 = arith.minsi %1, %c0_i32 : i32
    %c0_i32_0 = arith.constant 0 : i32
    return %2, %arg1 : i32, i32
  }
  func.func @transform_1(%arg0: i32, %arg1: i32, %arg2: i32) -> (i32, i32) {
    %c1_i32 = arith.constant 1 : i32
    %0 = arith.muli %arg0, %c1_i32 : i32
    %1 = arith.addi %0, %arg2 : i32
    %c0_i32 = arith.constant 0 : i32
    %2 = arith.minsi %1, %c0_i32 : i32
    %c0_i32_0 = arith.constant 0 : i32
    return %2, %arg1 : i32, i32
  }
  func.func @transform_2(%arg0: i32, %arg1: i32, %arg2: i32) -> (i32, i32, i32) {
    %c0_i32 = arith.constant 0 : i32
    %c0_i32_0 = arith.constant 0 : i32
    return %arg0, %c0_i32, %arg1 : i32, i32, i32
  }
}

</mosaic_0001>

<llo_original>
// kernel: tpu_custom_call.1
$region0: #{tpu_custom_call.1}
  #allocation0 [shape = 'u32[]', space=smem, size = 0x4, offset = 0x4, fixed_abs, tag = 'smem constant byte address 0x4 - core index']
  #allocation1 [shape = 'u32[144,128]{1,0:T(1,128)}', space=vmem, size = 0x12000, scoped, tag = 'internal scratch']
  #allocation2 [shape = 'f32[8,128]{1,0:T(8,128)}', space=vmem, size = 0x1000, scoped, tag = 'scratch operand']
  #allocation3 [shape = 'f32[8,128]{1,0:T(8,128)}', space=vmem, size = 0x1000, scoped, tag = 'scratch operand']
  #allocation4 [shape = 'f32[8,128]{1,0:T(8,128)}', space=vmem, size = 0x1000, scoped, tag = 'scratch operand']
  #allocation5 [shape = 'f32[8,128]{1,0:T(8,128)}', space=vmem, size = 0x1000, scoped, tag = 'scratch operand']
  #allocation6 [shape = 'f32[8,128]{1,0:T(8,128)}', space=vmem, size = 0x1000, scoped, tag = 'scratch operand']
  %s0 = inlined_call_operand.hbm [shape: f32[16,128], index: 0, kind: input, shape index: {}]
  %s1 = inlined_call_operand.hbm [shape: f32[16,128], index: 1, kind: input, shape index: {}]
  %s2 = inlined_call_operand.vmem [shape: f32[1,5,128], index: 2, kind: output, shape index: {}]
  %s3 = sld [smem:[#allocation0]]
  $region42: #{tpu_custom_call.1} parent=0
    _
  %s5 = ssub.s32 1, %s3
  %s6 = scalar_select 0, %s5, %s3
  $region1: #{tpu_custom_call.1} parent=0
    #allocation7 [shape = 'u8[8192]{0}', space=vmem, size = 0x2000, scoped, tag = 'input window, operand 0, single buffered']
    #allocation8 [shape = 's32[1]{0}', space=sflag, size = 0x4, scoped, tag = 'scoped memory for tpu_custom_call.1']
    #allocation9 [shape = 'u8[8192]{0}', space=vmem, size = 0x2000, scoped, tag = 'input window, operand 1, single buffered']
    #allocation10 [shape = 's32[1]{0}', space=sflag, size = 0x4, scoped, tag = 'scoped memory for tpu_custom_call.1']
    %7 = vsyncpa [#allocation8], 0
    %8 = vsyncpa [#allocation10], 0
    // Predicated region
    $region2: #{tpu_custom_call.1} parent=1 // pred_check
      _
    $region3: #{tpu_custom_call.1} parent=1 // pred_check_branch
      %10 = sbr.rel (0) target = $region5
    $region4: #{tpu_custom_call.1} parent=1 // pred_region
      %s11 = sadd.s32 0, 0
      %p12 = scmp.lt.s32.totalorder %s11, 0
      %s13 = scalar_select %p12, %s11, 0
      %s14 = smul.u32 2, %s13
      %s16 = ssub.s32 256, 256
      %17 = vsyncadd [#allocation8], %s16
      %s18 = smul.addr %s14, 128
      %s19 = scalar_lea.hbm %s0, %s18
      %s20 = sshll.u32 [#allocation7], 4
      %s21 = int_to_ptr.vmem [resolvable:$true] %s20
      %26 = dma.hbm_to_vmem [thread:$0]  %s19, 256, %s21, [#allocation8], 128, 128, 8
    $region5: #{tpu_custom_call.1} parent=1 // pred_fallthru
      _
    // Predicated region
    $region6: #{tpu_custom_call.1} parent=1 // pred_check
      _
    $region7: #{tpu_custom_call.1} parent=1 // pred_check_branch
      %28 = sbr.rel (0) target = $region9
    $region8: #{tpu_custom_call.1} parent=1 // pred_region
      %s29 = sadd.s32 0, 0
      %p30 = scmp.lt.s32.totalorder %s29, 0
      %s31 = scalar_select %p30, %s29, 0
      %s32 = smul.u32 2, %s31
      %s34 = ssub.s32 256, 256
      %35 = vsyncadd [#allocation10], %s34
      %s36 = smul.addr %s32, 128
      %s37 = scalar_lea.hbm %s1, %s36
      %s38 = sshll.u32 [#allocation9], 4
      %s39 = int_to_ptr.vmem [resolvable:$true] %s38
      %44 = dma.hbm_to_vmem [thread:$0]  %s37, 256, %s39, [#allocation10], 128, 128, 8
    $region9: #{tpu_custom_call.1} parent=1 // pred_fallthru
      _
    // Predicated region
    $region10: #{tpu_custom_call.1} parent=1 // pred_check
      _
    $region11: #{tpu_custom_call.1} parent=1 // pred_check_branch
      %46 = sbr.rel (0) target = $region13
    $region12: #{tpu_custom_call.1} parent=1 // pred_region
      %47 = dma.done [#allocation8], 256
    $region13: #{tpu_custom_call.1} parent=1 // pred_fallthru
      _
    // Predicated region
    $region14: #{tpu_custom_call.1} parent=1 // pred_check
      _
    $region15: #{tpu_custom_call.1} parent=1 // pred_check_branch
      %49 = sbr.rel (0) target = $region17
    $region16: #{tpu_custom_call.1} parent=1 // pred_region
      %50 = dma.done [#allocation10], 256
    $region17: #{tpu_custom_call.1} parent=1 // pred_fallthru
      _
    %s51 = sadd.s32 0, 0
    %p52 = scmp.lt.s32.totalorder %s51, 0
    %s53 = scalar_select %p52, %s51, 0
    %s54 = smul.u32 2, %s53
    %s55 = sadd.s32 0, 0
    %p56 = scmp.lt.s32.totalorder %s55, 0
    %s57 = scalar_select %p56, %s55, 0
    %s58 = smul.u32 2, %s57
    %s59 = sadd.s32 0, 0
    %s60 = smul.u32 %s59, 16
    %s61 = ssub.s32 16, %s60
    %p62 = scmp.eq.s32.totalorder 0, 0
    // Predicated region
    $region18: #{tpu_custom_call.1} parent=1 // pred_check
      %p63 = pneg %p62
    $region19: #{tpu_custom_call.1} parent=1 // pred_check_branch
      %65 = sbr.rel (%p63) target = $region21
    $region20: #{tpu_custom_call.1} parent=1 // pred_region
      %66 = vst [vmem:[#allocation2] sm:$0xff] 0.0
      %67 = vst [vmem:[#allocation3] sm:$0xff] 0.0
      %68 = vst [vmem:[#allocation4] sm:$0xff] 0.0
      %69 = vst [vmem:[#allocation5] sm:$0xff] 0.0
      %70 = vst [vmem:[#allocation6] sm:$0xff] 0.0
    $region21: #{tpu_custom_call.1} parent=1 // pred_fallthru
      _
    %p71 = scmp.ge.s32.totalorder %s61, 16
    // Predicated region
    $region22: #{tpu_custom_call.1} parent=1 // pred_check
      %p72 = pneg %p71
    $region23: #{tpu_custom_call.1} parent=1 // pred_check_branch
      %74 = sbr.rel (%p72) target = $region25
    $region24: #{tpu_custom_call.1} parent=1 // pred_region
      %v75 = vld [vmem:[#allocation7] sm:$0xff]
      %v76 = vld [vmem:[#allocation7 + $0x8] sm:$0xff]
      %v77 = vld [vmem:[#allocation9] sm:$0xff]
      %v78 = vld [vmem:[#allocation9 + $0x8] sm:$0xff]
      %v79 = vld [vmem:[#allocation2] sm:$0xff]
      %v80 = vmul.f32 %v75, %v77
      %v81 = vmul.f32 %v76, %v78
      %v82 = vadd.f32 %v80, %v81
      %v83 = vadd.f32 %v79, %v82
      %84 = vst [vmem:[#allocation2] sm:$0xff] %v83
      %v85 = vld [vmem:[#allocation3] sm:$0xff]
      %v86 = vadd.f32 %v75, %v76
      %v87 = vadd.f32 %v85, %v86
      %88 = vst [vmem:[#allocation3] sm:$0xff] %v87
      %v89 = vld [vmem:[#allocation4] sm:$0xff]
      %v90 = vmul.f32 %v75, %v75
      %v91 = vmul.f32 %v76, %v76
      %v92 = vadd.f32 %v90, %v91
      %v93 = vadd.f32 %v89, %v92
      %94 = vst [vmem:[#allocation4] sm:$0xff] %v93
      %v95 = vld [vmem:[#allocation5] sm:$0xff]
      %v96 = vadd.f32 %v77, %v78
      %v97 = vadd.f32 %v95, %v96
      %98 = vst [vmem:[#allocation5] sm:$0xff] %v97
      %v99 = vld [vmem:[#allocation6] sm:$0xff]
      %v100 = vmul.f32 %v77, %v77
      %v101 = vmul.f32 %v78, %v78
      %v102 = vadd.f32 %v100, %v101
      %v103 = vadd.f32 %v99, %v102
      %104 = vst [vmem:[#allocation6] sm:$0xff] %v103
    $region25: #{tpu_custom_call.1} parent=1 // pred_fallthru
      _
    %p105 = scmp.lt.s32.totalorder %s61, 16
    // Predicated region
    $region26: #{tpu_custom_call.1} parent=1 // pred_check
      %p106 = pneg %p105
    $region27: #{tpu_custom_call.1} parent=1 // pred_check_branch
      %108 = sbr.rel (%p106) target = $region29
    $region28: #{tpu_custom_call.1} parent=1 // pred_region
      %v109 = vlaneseq
      %v110 = vshrl.u32 %v109, 7
      %v111 = vadd.s32 %v110, 8
      %v112 = vstv %s61
      %vm113 = vcmp.lt.s32.totalorder %v110, %v112
      %vm114 = vcmp.lt.s32.totalorder %v111, %v112
      %v115 = vld [vmem:[#allocation7] sm:$0xff]
      %v116 = vld [vmem:[#allocation7 + $0x8] sm:$0xff]
      %v117 = vsel %vm113, %v115, 0.0
      %v118 = vsel %vm114, %v116, 0.0
      %v119 = vld [vmem:[#allocation9] sm:$0xff]
      %v120 = vld [vmem:[#allocation9 + $0x8] sm:$0xff]
      %v121 = vsel %vm113, %v119, 0.0
      %v122 = vsel %vm114, %v120, 0.0
      %v123 = vld [vmem:[#allocation2] sm:$0xff]
      %v124 = vmul.f32 %v117, %v121
      %v125 = vmul.f32 %v118, %v122
      %v126 = vadd.f32 %v124, %v125
      %v127 = vadd.f32 %v123, %v126
      %128 = vst [vmem:[#allocation2] sm:$0xff] %v127
      %v129 = vld [vmem:[#allocation3] sm:$0xff]
      %v130 = vadd.f32 %v117, %v118
      %v131 = vadd.f32 %v129, %v130
      %132 = vst [vmem:[#allocation3] sm:$0xff] %v131
      %v133 = vld [vmem:[#allocation4] sm:$0xff]
      %v134 = vmul.f32 %v117, %v117
      %v135 = vmul.f32 %v118, %v118
      %v136 = vadd.f32 %v134, %v135
      %v137 = vadd.f32 %v133, %v136
      %138 = vst [vmem:[#allocation4] sm:$0xff] %v137
      %v139 = vld [vmem:[#allocation5] sm:$0xff]
      %v140 = vadd.f32 %v121, %v122
      %v141 = vadd.f32 %v139, %v140
      %142 = vst [vmem:[#allocation5] sm:$0xff] %v141
      %v143 = vld [vmem:[#allocation6] sm:$0xff]
      %v144 = vmul.f32 %v121, %v121
      %v145 = vmul.f32 %v122, %v122
      %v146 = vadd.f32 %v144, %v145
      %v147 = vadd.f32 %v143, %v146
      %148 = vst [vmem:[#allocation6] sm:$0xff] %v147
    $region29: #{tpu_custom_call.1} parent=1 // pred_fallthru
      _
    // Predicated region
    $region30: #{tpu_custom_call.1} parent=1 // pred_check
      %p149 = pneg %p62
    $region31: #{tpu_custom_call.1} parent=1 // pred_check_branch
      %151 = sbr.rel (%p149) target = $region33
    $region32: #{tpu_custom_call.1} parent=1 // pred_region
      %v152 = vld [vmem:[#allocation2] sm:$0xff]
      %v153 = vrot.slane %v152, 4
      %v154 = vadd.f32 %v152, %v153
      %v155 = vrot.slane %v154, 2
      %v156 = vadd.f32 %v154, %v155
      %v157 = vrot.slane %v156, 1
      %v158 = vadd.f32 %v156, %v157
      %159 = vst [vmem:[%s2] sm:$0x1] %v158
      %v160 = vld [vmem:[#allocation3] sm:$0xff]
      %v161 = vrot.slane %v160, 4
      %v162 = vadd.f32 %v160, %v161
      %v163 = vrot.slane %v162, 2
      %v164 = vadd.f32 %v162, %v163
      %v165 = vrot.slane %v164, 1
      %v166 = vadd.f32 %v164, %v165
      %167 = vst [vmem:[%s2 + $0x1] sm:$0x1] %v166
      %v168 = vld [vmem:[#allocation4] sm:$0xff]
      %v169 = vrot.slane %v168, 4
      %v170 = vadd.f32 %v168, %v169
      %v171 = vrot.slane %v170, 2
      %v172 = vadd.f32 %v170, %v171
      %v173 = vrot.slane %v172, 1
      %v174 = vadd.f32 %v172, %v173
      %175 = vst [vmem:[%s2 + $0x2] sm:$0x1] %v174
      %v176 = vld [vmem:[#allocation5] sm:$0xff]
      %v177 = vrot.slane %v176, 4
      %v178 = vadd.f32 %v176, %v177
      %v179 = vrot.slane %v178, 2
      %v180 = vadd.f32 %v178, %v179
      %v181 = vrot.slane %v180, 1
      %v182 = vadd.f32 %v180, %v181
      %183 = vst [vmem:[%s2 + $0x3] sm:$0x1] %v182
      %v184 = vld [vmem:[#allocation6] sm:$0xff]
      %v185 = vrot.slane %v184, 4
      %v186 = vadd.f32 %v184, %v185
      %v187 = vrot.slane %v186, 2
      %v188 = vadd.f32 %v186, %v187
      %v189 = vrot.slane %v188, 1
      %v190 = vadd.f32 %v188, %v189
      %191 = vst [vmem:[%s2 + $0x4] sm:$0x1] %v190
    $region33: #{tpu_custom_call.1} parent=1 // pred_fallthru
      _
    // Predicated region
    $region34: #{tpu_custom_call.1} parent=1 // pred_check
      _
    $region35: #{tpu_custom_call.1} parent=1 // pred_check_branch
      %193 = sbr.rel (0) target = $region37
    $region36: #{tpu_custom_call.1} parent=1 // pred_region
      _
    $region37: #{tpu_custom_call.1} parent=1 // pred_fallthru
      _
    // Predicated region
    $region38: #{tpu_custom_call.1} parent=1 // pred_check
      _
    $region39: #{tpu_custom_call.1} parent=1 // pred_check_branch
      %195 = sbr.rel (0) target = $region41
    $region40: #{tpu_custom_call.1} parent=1 // pred_region
      _
    $region41: #{tpu_custom_call.1} parent=1 // pred_fallthru
      _
    %196 = vsyncpa [#allocation8], 1
    %197 = vsyncpa [#allocation10], 1

</llo_original>
